<compile_context>
chip_gen: v5e
topology: v5e:2x2
jax: 0.10.0
libtpu: 0.0.40
codegen_flags: <defaults>
</compile_context>

<pallas_src>
import jax
import jax.numpy as jnp
from jax.experimental import pallas as pl
from jax.experimental.pallas import tpu as pltpu


# ----------------------------------------------------------------------------- kernels
def _han_fused_kernel(adj_ref, z_ref, bmean_ref, o_ref):
    """Single step: whole (tiny) problem resident in VMEM, relations unrolled."""
    num_r = adj_ref.shape[0]
    acc = jnp.zeros(o_ref.shape, jnp.float32)
    for r in range(num_r):  # static unroll; num_relations is small
        acc = acc + jnp.dot(adj_ref[r], z_ref[r].astype(adj_ref.dtype),
                            preferred_element_type=jnp.float32)       # [N, F_out]
    o_ref[...] = acc * (1.0 / num_r) + bmean_ref[...]


def _han_tiled_kernel(adj_ref, z_ref, bmean_ref, o_ref):
    """grid = (row_tiles [parallel], relations [arbitrary reduction, innermost])."""
    r = pl.program_id(1)
    num_r = pl.num_programs(1)

    @pl.when(r == 0)
    def _():
        o_ref[...] = jnp.zeros_like(o_ref)

    # z_r was precomputed outside the grid; only the streamed adj tile matmul here.
    o_ref[...] += jnp.dot(adj_ref[0], z_ref[r].astype(adj_ref.dtype),
                          preferred_element_type=jnp.float32)          # [tm, F_out]

    @pl.when(r == num_r - 1)
    def _():
        o_ref[...] = o_ref[...] * (1.0 / num_r) + bmean_ref[...]


# ----------------------------------------------------------------------------- helpers
def _round_up(v, m):
    return (v + m - 1) // m * m


def _vmem_capacity_bytes():
    try:
        return int(pltpu.get_tpu_info().vmem_capacity_bytes)
    except Exception:
        return 64 << 20   # conservative fallback: v7x per-TensorCore VMEM


def _choose_row_tile(n_rows, n_cols, adj_itemsize, adj_buf_budget, sublane, n_bufs):
    """Largest sublane-multiple row tile whose adj buffers fit the budget,
    shrunk (when N allows) so the 'parallel' row axis has >= 2 tiles (megacore)."""
    n_pad_min = _round_up(n_rows, sublane)
    cap = (adj_buf_budget // max(1, n_bufs * n_cols * adj_itemsize)) // sublane * sublane
    tm = max(sublane, min(max(cap, sublane), n_pad_min))
    if n_pad_min >= 2 * sublane:
        two_tile_cap = _round_up((n_pad_min + 1) // 2, sublane)
        tm = min(tm, max(sublane, two_tile_cap))
    return tm


# ----------------------------------------------------------------------------- wrapper
def han_layer_forward(x, adj_stack, w_stack, b_stack, *,
                      adj_dtype=jnp.bfloat16, force_tiled=False,
                      row_tile=None, adj_buffer_count=2):
    """x: [N, F_in], adj_stack: [R, N, N], w_stack: [R, F_in, F_out],
    b_stack: [R, F_out] -> [N, F_out] float32."""
    R, N, _ = adj_stack.shape
    F_out = w_stack.shape[2]

    x32 = x.astype(jnp.float32)
    w32 = w_stack.astype(jnp.float32)
    # Hoisted out of the grid: z_r = x @ W_r, tiny [R, N, F_out], computed once.
    z_stack = jnp.einsum('nf,rfo->rno', x32, w32)
    # mean over relations of b_r, added once at the very end (not per relation)
    b_mean = jnp.mean(b_stack.astype(jnp.float32), axis=0, keepdims=True)  # [1, F_out]

    adj_c = adj_stack.astype(adj_dtype)
    adj_itemsize = jnp.dtype(adj_dtype).itemsize

    # --- tiny problems: one fused step, relations unrolled (a grid is pure overhead)
    fused_bytes = (R * N * N * adj_itemsize + R * N * F_out * 4
                   + N * F_out * 4 + F_out * 4)
    if not force_tiled and fused_bytes <= (2 << 20):
        return pl.pallas_call(
            _han_fused_kernel,
            out_shape=jax.ShapeDtypeStruct((N, F_out), jnp.float32),
        )(adj_c, z_stack, b_mean)

    # --- tiled path: stream adj row tiles, keep z / bias / output block resident
    sublane = 16 if adj_itemsize < 4 else 8
    vmem_cap = _vmem_capacity_bytes()
    adj_buf_budget = int(vmem_cap * 0.55)       # adj stream gets the lion's share
    if row_tile is not None:
        tm = max(sublane, _round_up(row_tile, sublane))
    else:
        tm = _choose_row_tile(N, N, adj_itemsize, adj_buf_budget, sublane,
                              adj_buffer_count)

    n_pad = _round_up(N, tm)
    if n_pad != N:
        adj_c = jnp.pad(adj_c, ((0, 0), (0, n_pad - N), (0, 0)))

    # Explicit scoped-VMEM limit: adj buffers + resident z / bias + output + slack.
    est = (adj_buffer_count * tm * N * adj_itemsize
           + 2 * R * N * F_out * 4
           + 2 * tm * F_out * 4
           + 2 * 8 * 128 * 4)
    vmem_limit = max(32 << 20, min(int(vmem_cap * 0.9), est + (8 << 20)))

    adj_spec_kwargs = {}
    if adj_buffer_count != 2:   # optional deeper pipelining; sweep before adopting
        adj_spec_kwargs["pipeline_mode"] = pl.Buffered(adj_buffer_count)

    grid_spec = pltpu.PrefetchScalarGridSpec(
        num_scalar_prefetch=0,
        grid=(n_pad // tm, R),                  # relation (reduction) axis last
        in_specs=[
            # adjacency row-tile: the only streamed operand
            pl.BlockSpec((1, tm, N), lambda i, r: (r, i, 0), **adj_spec_kwargs),
            # z stack and mean-bias: resident (constant index maps -> no re-DMA)
            pl.BlockSpec((R, N, F_out), lambda i, r: (0, 0, 0)),
            pl.BlockSpec((1, F_out), lambda i, r: (0, 0)),
        ],
        # output block depends only on the row-tile index -> resident across the
        # relation reduction axis; accumulate directly into it (no scratch).
        out_specs=pl.BlockSpec((tm, F_out), lambda i, r: (i, 0)),
    )
    out = pl.pallas_call(
        _han_tiled_kernel,
        out_shape=jax.ShapeDtypeStruct((n_pad, F_out), jnp.float32),
        grid_spec=grid_spec,
        compiler_params=pltpu.CompilerParams(
            dimension_semantics=("parallel", "arbitrary"),
            vmem_limit_bytes=vmem_limit),
    )(adj_c, z_stack, b_mean)
    return out[:N] if n_pad != N else out


# ----------------------------------------------------------------------------- reference
def han_layer_reference(x, adj_stack, w_stack, b_stack):
    outs = []
    for r in range(adj_stack.shape[0]):
        h = adj_stack[r] @ x
        outs.append(h @ w_stack[r] + b_stack[r])
    return jnp.mean(jnp.stack(outs, axis=0), axis=0)


# ----------------------------------------------------------------------------- test
if __name__ == "__main__":
    key = jax.random.PRNGKey(0)
    N = 16        # number of nodes
    F_in = 32     # in_features
    F_out = 8     # out_features (number of label classes)
    R = 3         # num_relations

    k0, k1, k2, k3 = jax.random.split(key, 4)
    x = jax.random.normal(k0, (N, F_in), dtype=jnp.float32)
    adj_stack = jax.random.uniform(k1, (R, N, N), dtype=jnp.float32)

    # nn.Linear-style params: PyTorch W_r is [F_out, F_in]; pre-transpose to [F_in, F_out].
    bound = 1.0 / (F_in ** 0.5)
    w_pt = jax.random.uniform(k2, (R, F_out, F_in), dtype=jnp.float32,
                              minval=-bound, maxval=bound)
    b_stack = jax.random.uniform(k3, (R, F_out), dtype=jnp.float32,
                                 minval=-bound, maxval=bound)
    w_stack = jnp.transpose(w_pt, (0, 2, 1))  # [R, F_in, F_out]

    ref = han_layer_reference(x, adj_stack, w_stack, b_stack)

    # 1) fused single-step path, f32 adj (exact-ish)
    out_f32 = jax.block_until_ready(
        han_layer_forward(x, adj_stack, w_stack, b_stack, adj_dtype=jnp.float32))
    assert out_f32.shape == (N, F_out)
    assert jnp.allclose(out_f32, ref, atol=1e-3, rtol=1e-3), "fused f32 mismatch"

    # 2) row-tiled + relation-reduction path, f32 adj
    out_t32 = jax.block_until_ready(
        han_layer_forward(x, adj_stack, w_stack, b_stack,
                          adj_dtype=jnp.float32, force_tiled=True))
    assert jnp.allclose(out_t32, ref, atol=1e-3, rtol=1e-3), "tiled f32 mismatch"

    # 3) default path: bf16 adj only (z / bias / accumulator stay f32)
    out_bf = jax.block_until_ready(han_layer_forward(x, adj_stack, w_stack, b_stack))
    assert jnp.allclose(out_bf, ref, atol=5e-2, rtol=5e-2), "fused bf16 mismatch"

    out_bft = jax.block_until_ready(
        han_layer_forward(x, adj_stack, w_stack, b_stack, force_tiled=True))
    assert jnp.allclose(out_bft, ref, atol=5e-2, rtol=5e-2), "tiled bf16 mismatch"

    print("KERNEL_OK")
</pallas_src>

<mosaic_0001>
module attributes {stable_mosaic.version = 11 : i64} {
  func.func @_han_fused_kernel(%arg0: memref<3x16x16xf32, #tpu.memory_space<vmem>>, %arg1: memref<3x16x8xf32, #tpu.memory_space<vmem>>, %arg2: memref<1x8xf32, #tpu.memory_space<vmem>>, %arg3: memref<16x8xf32, #tpu.memory_space<vmem>>) attributes {dimension_semantics = [], scalar_prefetch = 0 : i64, scratch_operands = 0 : i64, tpu.core_type = #tpu.core_type<tc>} {
    %cst = arith.constant 0.000000e+00 : f32
    %0 = vector.broadcast %cst : f32 to vector<16x8xf32>
    %c0 = arith.constant 0 : index
    %c0_0 = arith.constant 0 : index
    %c0_1 = arith.constant 0 : index
    %1 = vector.load %arg0[%c0, %c0_0, %c0_1] : memref<3x16x16xf32, #tpu.memory_space<vmem>>, vector<1x16x16xf32>
    %2 = vector.shape_cast %1 : vector<1x16x16xf32> to vector<16x16xf32>
    %c0_2 = arith.constant 0 : index
    %c0_3 = arith.constant 0 : index
    %c0_4 = arith.constant 0 : index
    %3 = vector.load %arg1[%c0_2, %c0_3, %c0_4] : memref<3x16x8xf32, #tpu.memory_space<vmem>>, vector<1x16x8xf32>
    %4 = vector.shape_cast %3 : vector<1x16x8xf32> to vector<16x8xf32>
    %cst_5 = arith.constant dense<0.000000e+00> : vector<16x8xf32>
    %5 = tpu.matmul %2, %4, %cst_5 {dimension_numbers = #tpu.dot_dimension_numbers<[1], [0], [0], [1], [0, 0, 1, 1], [], []>} : vector<16x16xf32>, vector<16x8xf32>, vector<16x8xf32> -> vector<16x8xf32>
    %6 = arith.addf %0, %5 : vector<16x8xf32>
    %c1 = arith.constant 1 : index
    %c0_6 = arith.constant 0 : index
    %c0_7 = arith.constant 0 : index
    %7 = vector.load %arg0[%c1, %c0_6, %c0_7] : memref<3x16x16xf32, #tpu.memory_space<vmem>>, vector<1x16x16xf32>
    %8 = vector.shape_cast %7 : vector<1x16x16xf32> to vector<16x16xf32>
    %c1_8 = arith.constant 1 : index
    %c0_9 = arith.constant 0 : index
    %c0_10 = arith.constant 0 : index
    %9 = vector.load %arg1[%c1_8, %c0_9, %c0_10] : memref<3x16x8xf32, #tpu.memory_space<vmem>>, vector<1x16x8xf32>
    %10 = vector.shape_cast %9 : vector<1x16x8xf32> to vector<16x8xf32>
    %cst_11 = arith.constant dense<0.000000e+00> : vector<16x8xf32>
    %11 = tpu.matmul %8, %10, %cst_11 {dimension_numbers = #tpu.dot_dimension_numbers<[1], [0], [0], [1], [0, 0, 1, 1], [], []>} : vector<16x16xf32>, vector<16x8xf32>, vector<16x8xf32> -> vector<16x8xf32>
    %12 = arith.addf %6, %11 : vector<16x8xf32>
    %c2 = arith.constant 2 : index
    %c0_12 = arith.constant 0 : index
    %c0_13 = arith.constant 0 : index
    %13 = vector.load %arg0[%c2, %c0_12, %c0_13] : memref<3x16x16xf32, #tpu.memory_space<vmem>>, vector<1x16x16xf32>
    %14 = vector.shape_cast %13 : vector<1x16x16xf32> to vector<16x16xf32>
    %c2_14 = arith.constant 2 : index
    %c0_15 = arith.constant 0 : index
    %c0_16 = arith.constant 0 : index
    %15 = vector.load %arg1[%c2_14, %c0_15, %c0_16] : memref<3x16x8xf32, #tpu.memory_space<vmem>>, vector<1x16x8xf32>
    %16 = vector.shape_cast %15 : vector<1x16x8xf32> to vector<16x8xf32>
    %cst_17 = arith.constant dense<0.000000e+00> : vector<16x8xf32>
    %17 = tpu.matmul %14, %16, %cst_17 {dimension_numbers = #tpu.dot_dimension_numbers<[1], [0], [0], [1], [0, 0, 1, 1], [], []>} : vector<16x16xf32>, vector<16x8xf32>, vector<16x8xf32> -> vector<16x8xf32>
    %18 = arith.addf %12, %17 : vector<16x8xf32>
    %cst_18 = arith.constant 0.333333343 : f32
    %19 = vector.broadcast %cst_18 : f32 to vector<16x8xf32>
    %20 = arith.mulf %18, %19 : vector<16x8xf32>
    %c0_19 = arith.constant 0 : index
    %c0_20 = arith.constant 0 : index
    %21 = vector.load %arg2[%c0_19, %c0_20] : memref<1x8xf32, #tpu.memory_space<vmem>>, vector<1x8xf32>
    %22 = vector.broadcast %21 : vector<1x8xf32> to vector<16x8xf32>
    %23 = arith.addf %20, %22 : vector<16x8xf32>
    %c0_21 = arith.constant 0 : index
    %c0_22 = arith.constant 0 : index
    %24 = vector.load %arg3[%c0_21, %c0_22] : memref<16x8xf32, #tpu.memory_space<vmem>>, vector<16x8xf32>
    tpu.vector_store %arg3[%c0_21, %c0_22], %23 {strides = array<i32>} : memref<16x8xf32, #tpu.memory_space<vmem>>, vector<16x8xf32>,
    return
  }
}

</mosaic_0001>

<llo_original>
// kernel: tpu_custom_call.1
$region0: #{tpu_custom_call.1}
  #allocation0 [shape = 'u32[]', space=smem, size = 0x4, offset = 0x4, fixed_abs, tag = 'smem constant byte address 0x4 - core index']
  #allocation1 [shape = 'u32[72,128]{1,0:T(1,128)}', space=vmem, size = 0x9000, scoped, tag = 'internal scratch']
  %s0 = inlined_call_operand.vmem [shape: f32[3,16,16], index: 0, kind: input, shape index: {}]
  %s1 = inlined_call_operand.vmem [shape: f32[3,16,8], index: 1, kind: input, shape index: {}]
  %s2 = inlined_call_operand.vmem [shape: f32[1,8], index: 2, kind: input, shape index: {}]
  %s3 = inlined_call_operand.vmem [shape: f32[16,8], index: 3, kind: output, shape index: {}]
  %s4 = sld [smem:[#allocation0]]
  $region22: #{tpu_custom_call.1} parent=0
    _
  %s6 = ssub.s32 1, %s4
  %s7 = scalar_select 0, %s6, %s4
  // Predicated region
  $region2: #{tpu_custom_call.1} parent=0 // pred_check
    _
  $region3: #{tpu_custom_call.1} parent=0 // pred_check_branch
    %9 = sbr.rel (0) target = $region5
  $region4: #{tpu_custom_call.1} parent=0 // pred_region
    _
  $region5: #{tpu_custom_call.1} parent=0 // pred_fallthru
    _
  // Predicated region
  $region6: #{tpu_custom_call.1} parent=0 // pred_check
    _
  $region7: #{tpu_custom_call.1} parent=0 // pred_check_branch
    %11 = sbr.rel (0) target = $region9
  $region8: #{tpu_custom_call.1} parent=0 // pred_region
    _
  $region9: #{tpu_custom_call.1} parent=0 // pred_fallthru
    _
  // Predicated region
  $region10: #{tpu_custom_call.1} parent=0 // pred_check
    _
  $region11: #{tpu_custom_call.1} parent=0 // pred_check_branch
    %13 = sbr.rel (0) target = $region13
  $region12: #{tpu_custom_call.1} parent=0 // pred_region
    _
  $region13: #{tpu_custom_call.1} parent=0 // pred_fallthru
    _
  %v14 = vld [vmem:[%s0] sm:$0xff]
  %v15 = vld [vmem:[%s0 + $0x8] sm:$0xff]
  %v16 = vld [vmem:[%s1] sm:$0xff]
  %v17 = vld [vmem:[%s1 + $0x8] sm:$0xff]
  %s18 = scalar_lea.vmem %s0, 16
  %v19 = vld [vmem:[%s18] sm:$0xff]
  %v20 = vld [vmem:[%s18 + $0x8] sm:$0xff]
  %s21 = scalar_lea.vmem %s1, 16
  %v22 = vld [vmem:[%s21] sm:$0xff]
  %v23 = vld [vmem:[%s21 + $0x8] sm:$0xff]
  %vm24 = vcmask 130048
  %v26 = vsel %vm24, %v19, 0
  %v29 = vsel %vm24, %v20, 0
  %31 = vmatpush.msra.mxu0 0.0
  %32 = vmatpush.msra.mxu0 0.0
  %33 = vmatpush.msra.mxu0 0.0
  %34 = vmatpush.msra.mxu0 0.0
  %35 = vmatpush.msra.mxu0 0.0
  %36 = vmatpush.msra.mxu0 0.0
  %37 = vmatpush.msra.mxu0 0.0
  %38 = vmatpush.msra.mxu0 0.0
  %39 = vmatpush.msra.mxu0 0.0
  %40 = vmatpush.msra.mxu0 0.0
  %41 = vmatpush.msra.mxu0 0.0
  %42 = vmatpush.msra.mxu0 0.0
  %43 = vmatpush.msra.mxu0 0.0
  %44 = vmatpush.msra.mxu0 0.0
  %45 = vmatpush.msra.mxu0 %v23
  %46 = vmatpush.msra.mxu0 %v22
  %47 = vmatmul.f32.gmra.mxu0 %v26
  %v48 = vpop.f32.mrf.mxu0
  %v49 = vadd.f32 0.0, %v48
  %50 = vmatmul.f32.gmra.mxu0 %v29
  %v51 = vpop.f32.mrf.mxu0
  %v52 = vadd.f32 0.0, %v51
  %53 = vdwg.mxu0
  %v55 = vsel %vm24, %v14, 0
  %v58 = vsel %vm24, %v15, 0
  %60 = vmatpush.msra.mxu0 0.0
  %61 = vmatpush.msra.mxu0 0.0
  %62 = vmatpush.msra.mxu0 0.0
  %63 = vmatpush.msra.mxu0 0.0
  %64 = vmatpush.msra.mxu0 0.0
  %65 = vmatpush.msra.mxu0 0.0
  %66 = vmatpush.msra.mxu0 0.0
  %67 = vmatpush.msra.mxu0 0.0
  %68 = vmatpush.msra.mxu0 0.0
  %69 = vmatpush.msra.mxu0 0.0
  %70 = vmatpush.msra.mxu0 0.0
  %71 = vmatpush.msra.mxu0 0.0
  %72 = vmatpush.msra.mxu0 0.0
  %73 = vmatpush.msra.mxu0 0.0
  %74 = vmatpush.msra.mxu0 %v17
  %75 = vmatpush.msra.mxu0 %v16
  %76 = vmatmul.f32.gmra.mxu0 %v55
  %v77 = vpop.f32.mrf.mxu0
  %v78 = vadd.f32 %v49, %v77
  %79 = vmatmul.f32.gmra.mxu0 %v58
  %v80 = vpop.f32.mrf.mxu0
  %v81 = vadd.f32 %v52, %v80
  %82 = vdwg.mxu0
  %s83 = scalar_lea.vmem %s0, 32
  %v84 = vld [vmem:[%s83] sm:$0xff]
  %v85 = vld [vmem:[%s83 + $0x8] sm:$0xff]
  %s86 = scalar_lea.vmem %s1, 32
  %v87 = vld [vmem:[%s86] sm:$0xff]
  %v88 = vld [vmem:[%s86 + $0x8] sm:$0xff]
  %v90 = vsel %vm24, %v84, 0
  %v93 = vsel %vm24, %v85, 0
  %95 = vmatpush.msra.mxu0 0.0
  %96 = vmatpush.msra.mxu0 0.0
  %97 = vmatpush.msra.mxu0 0.0
  %98 = vmatpush.msra.mxu0 0.0
  %99 = vmatpush.msra.mxu0 0.0
  %100 = vmatpush.msra.mxu0 0.0
  %101 = vmatpush.msra.mxu0 0.0
  %102 = vmatpush.msra.mxu0 0.0
  %103 = vmatpush.msra.mxu0 0.0
  %104 = vmatpush.msra.mxu0 0.0
  %105 = vmatpush.msra.mxu0 0.0
  %106 = vmatpush.msra.mxu0 0.0
  %107 = vmatpush.msra.mxu0 0.0
  %108 = vmatpush.msra.mxu0 0.0
  %109 = vmatpush.msra.mxu0 %v88
  %110 = vmatpush.msra.mxu0 %v87
  %111 = vmatmul.f32.gmra.mxu0 %v90
  %v112 = vpop.f32.mrf.mxu0
  %v113 = vadd.f32 0.0, %v112
  %114 = vmatmul.f32.gmra.mxu0 %v93
  %v115 = vpop.f32.mrf.mxu0
  %v116 = vadd.f32 0.0, %v115
  %117 = vdwg.mxu0
  %v118 = vadd.f32 %v78, %v113
  %v119 = vadd.f32 %v81, %v116
  %v120 = vmul.f32 %v118, 0.33333334
  %v121 = vmul.f32 %v119, 0.33333334
  %v122 = vld [vmem:[%s2] sm:$0x1]
  %v124 = vperm.slane %v122, 0
  %v126 = vadd.f32 %v120, %v124
  %v127 = vadd.f32 %v121, %v124
  %vm128 = vcmask 64512
  %129 = vst.msk [vmem:[%s3] sm:$0xff] %vm128, %v126
  %130 = vst.msk [vmem:[%s3 + $0x8] sm:$0xff] %vm128, %v127
  // Predicated region
  $region14: #{tpu_custom_call.1} parent=0 // pred_check
    _
  $region15: #{tpu_custom_call.1} parent=0 // pred_check_branch
    %132 = sbr.rel (0) target = $region17
  $region16: #{tpu_custom_call.1} parent=0 // pred_region
    _
  $region17: #{tpu_custom_call.1} parent=0 // pred_fallthru
    _
  // Predicated region
  $region18: #{tpu_custom_call.1} parent=0 // pred_check
    _
  $region19: #{tpu_custom_call.1} parent=0 // pred_check_branch
    %134 = sbr.rel (0) target = $region21
  $region20: #{tpu_custom_call.1} parent=0 // pred_region
    _
  $region21: #{tpu_custom_call.1} parent=0 // pred_fallthru
    _

</llo_original>
